<compile_context>
chip_gen: v5e
topology: v5e:2x2
jax: 0.10.0
libtpu: 0.0.40
codegen_flags: <defaults>
</compile_context>

<pallas_src>
import functools
import numpy as np
import jax
import jax.numpy as jnp
from jax.experimental import pallas as pl
from jax.experimental.pallas import tpu as pltpu

# ----------------------- hyper-params (the Namespace) -----------------------
EMBED_DIM    = 32
K_HOP        = 2
V2E_WITH_REL = True
MARK_QUERY   = True          # p.mark_query is not None
HAGG_METHOD  = "mean"        # != 'settrans'  -> per-edge gather path

N_V, NUM_REL = 10, 6
NUM_DIS = 2 * K_HOP + 3      # size of distance-embedding table (offset in forward)


def _round_up(x, m):
    return ((x + m - 1) // m) * m


# ------------------------------ Pallas kernel --------------------------------
def _fused_hyperagg_kernel(out_off_ref, has_tgt_ref,          # SMEM scalar prefetch
                           init_ref, a_ref, ws_ref, wt_ref,   # VMEM inputs
                           tab_ref,                           # VMEM-resident output slab
                           acc_ref,                           # VMEM scratch (T_pad, D)
                           *, t_pad):
    l = pl.program_id(0)

    # Load the static rows (dis / rel embeddings, zeros elsewhere) once.
    @pl.when(l == 0)
    def _():
        tab_ref[...] = init_ref[...]

    A = a_ref[0]                                              # (T_pad, R_pad)

    # src side:  mean-aggregated source embeddings, then weight transform (MXU)
    src_agg = jnp.dot(A, tab_ref[...], preferred_element_type=jnp.float32)   # (T_pad, D)
    acc_ref[...] = jnp.dot(src_agg, ws_ref[0], preferred_element_type=jnp.float32)

    off = pl.multiple_of(out_off_ref[l], 8)                   # output-region row offset

    # tgt side (only for layers whose target embedding is not None):
    # scatter-mean of tab[out_region][dst] over incident edges == the row itself
    # (masked to zero for targets with no incident edge).
    @pl.when(has_tgt_ref[l] == 1)
    def _():
        deg = jnp.sum(A, axis=1, keepdims=True)               # ~1.0 if deg>0 else 0.0 (XLU)
        mask = jnp.where(deg > 0.5, 1.0, 0.0)                 # exact 0/1          (VPU)
        prev = tab_ref[pl.ds(off, t_pad), :]                  # previous-layer values
        acc_ref[...] += jnp.dot(prev * mask, wt_ref[0],
                                preferred_element_type=jnp.float32)

    # ReLU epilogue (f32, VPU) and in-place update of the resident table.
    tab_ref[pl.ds(off, t_pad), :] = jnp.maximum(acc_ref[...], 0.0)


def fused_hyperagg(out_off, has_tgt, init_tab, a_stack, ws_stack, wt_stack):
    """Run all layers in one pallas_call; returns the final unified table."""
    L, T_pad, R_pad = a_stack.shape
    D = init_tab.shape[1]
    kernel = functools.partial(_fused_hyperagg_kernel, t_pad=T_pad)
    return pl.pallas_call(
        kernel,
        out_shape=jax.ShapeDtypeStruct((R_pad, D), jnp.float32),
        grid_spec=pltpu.PrefetchScalarGridSpec(
            num_scalar_prefetch=2,
            grid=(L,),
            in_specs=[
                pl.BlockSpec((R_pad, D),        lambda l, *_: (0, 0)),    # init table
                pl.BlockSpec((1, T_pad, R_pad), lambda l, *_: (l, 0, 0)),  # A[l]
                pl.BlockSpec((1, D, D),         lambda l, *_: (l, 0, 0)),  # W_src[l]
                pl.BlockSpec((1, D, D),         lambda l, *_: (l, 0, 0)),  # W_tgt[l]
            ],
            out_specs=pl.BlockSpec((R_pad, D), lambda l, *_: (0, 0)),      # resident slab
            scratch_shapes=[pltpu.VMEM((T_pad, D), jnp.float32)],
        ),
        # layers are sequentially dependent through the resident table
        compiler_params=pltpu.CompilerParams(dimension_semantics=("arbitrary",)),
    )(out_off, has_tgt, init_tab, a_stack, ws_stack, wt_stack)


# ------------------------- host-side graph preprocessing ----------------------
def build_graph_plan(graph):
    """torch.no_grad() graph plumbing, done ONCE per graph (numpy, host)."""
    V2E   = np.stack([graph["v2e_src"], graph["v2e_dst"]]).astype(np.int64)
    attr  = graph["v2e_attr"].astype(np.int64)
    v_dis = graph["v_dis"].astype(np.int64)
    src_mark = graph["source_hedge_mark"].astype(bool)
    pos_mark = graph["pos_target_mark"].astype(bool)
    neg_mark = graph["neg_target_mark"].astype(bool)
    query_rel = graph["batch_query_rel"].astype(np.int64)
    subg_ent_num = np.unique(graph["node_x"]).size
    n_hedge = int(V2E[1].max()) + 1

    dis_edge = V2E.copy()
    dis_edge[0] = v_dis[dis_edge[0]]
    E2V = np.stack([V2E[1], V2E[0]])

    if V2E_WITH_REL:
        rel_edge  = np.stack([attr + subg_ent_num, V2E[1]])
        drel_edge = np.stack([attr + 2 * K_HOP + 3, dis_edge[1]])
        V2E      = np.concatenate([V2E, rel_edge], axis=1)
        dis_edge = np.concatenate([dis_edge, drel_edge], axis=1)

    query_hypere = np.unique(V2E[1][src_mark[V2E[1]]])
    if MARK_QUERY:
        query_edge  = np.stack([query_rel + subg_ent_num, query_hypere])
        dquery_edge = np.stack([query_rel + 2 * K_HOP + 3, query_hypere])
        V2E      = np.concatenate([V2E, query_edge], axis=1)
        dis_edge = np.concatenate([dis_edge, dquery_edge], axis=1)

    # coalesce(..., sort_by_row=False): dedup (ordering irrelevant to mean-agg)
    V2E = np.unique(V2E, axis=1)
    E2V = np.unique(E2V, axis=1)

    # unified row space: [entity | hyperedge | distance | relation] regions
    T_pad     = _round_up(max(subg_ent_num, n_hedge, 8), 8)
    ENT_OFF   = 0
    HEDGE_OFF = T_pad
    DIS_OFF   = 2 * T_pad
    REL_OFF   = DIS_OFF + _round_up(NUM_DIS, 8)
    R_pad     = _round_up(REL_OFF + NUM_REL, 8)

    def layer_A(src_rows, dst):
        # A[t, r] = (#edges with dst==t, src==r) / max(deg(t), 1)  (scatter-mean folded)
        A = np.zeros((T_pad, R_pad), np.float64)
        np.add.at(A, (dst, src_rows), 1.0)
        deg = A.sum(axis=1, keepdims=True)
        return (A / np.maximum(deg, 1.0)).astype(np.float32)

    A_list, off_list, tgt_list, wsel = [], [], [], []
    for k in range(K_HOP + 1):
        # ---- V2E conv (k-th) ----
        if k == 0:
            s = dis_edge[0]          # indices into concat(dis_embedding, rel_embedding)
            src_u = np.where(s < NUM_DIS, DIS_OFF + s, REL_OFF + (s - NUM_DIS))
            dst = dis_edge[1]
        else:
            s = V2E[0]               # indices into concat(subg_ent_emb, rel_embedding)
            src_u = np.where(s < subg_ent_num, ENT_OFF + s, REL_OFF + (s - subg_ent_num))
            dst = V2E[1]
        A_list.append(layer_A(src_u, dst))
        off_list.append(HEDGE_OFF)
        tgt_list.append(0 if k == 0 else 1)      # subg_hedge_emb is None only at k==0
        wsel.append(("V2E", k))
        # ---- E2V conv (k-th) ----
        if k < K_HOP:
            src_u = HEDGE_OFF + E2V[0]
            dst = E2V[1]
            A_list.append(layer_A(src_u, dst))
            off_list.append(ENT_OFF)
            tgt_list.append(0 if k == 0 else 1)  # target None at k==0
            wsel.append(("E2V", k))

    return dict(
        a_stack=np.stack(A_list),                          # (L, T_pad, R_pad) f32
        out_off=np.asarray(off_list, np.int32),
        has_tgt=np.asarray(tgt_list, np.int32),
        wsel=wsel,
        T_pad=T_pad, R_pad=R_pad,
        ENT_OFF=ENT_OFF, HEDGE_OFF=HEDGE_OFF, DIS_OFF=DIS_OFF, REL_OFF=REL_OFF,
        subg_ent_num=subg_ent_num, n_hedge=n_hedge,
        src_hedge_rows=np.flatnonzero(src_mark),
        pos_subg_id=np.unique(E2V[1][pos_mark[E2V[1]]]),
        neg_subg_id=np.unique(E2V[1][neg_mark[E2V[1]]]),
    )


# ------------------------------ parameter init --------------------------------
def _glorot(key, shape):
    lim = float(np.sqrt(6.0 / (shape[0] + shape[1])))
    return jax.random.uniform(key, shape, jnp.float32, -lim, lim)


def init_params(key):
    keys = jax.random.split(key, 4 + 4 * (K_HOP + 1))
    params = {
        # present in __init__ but unused in forward (kept for parity):
        "cls_edge_emb": _glorot(keys[0], (1, EMBED_DIM)),
        "pad_edge_emb": _glorot(keys[1], (1, EMBED_DIM)),
        "lin_rel_w":    _glorot(keys[2], (EMBED_DIM, EMBED_DIM)),
        "agg_layer_w":  _glorot(keys[3], (EMBED_DIM, EMBED_DIM)),
        "V2E": [],
        "E2V": [],
    }
    for k in range(K_HOP + 1):
        kk = keys[4 + 4 * k: 8 + 4 * k]
        params["V2E"].append((_glorot(kk[0], (EMBED_DIM, EMBED_DIM)),
                              _glorot(kk[1], (EMBED_DIM, EMBED_DIM))))
        params["E2V"].append((_glorot(kk[2], (EMBED_DIM, EMBED_DIM)),
                              _glorot(kk[3], (EMBED_DIM, EMBED_DIM))))
    return params


# -------------------------------- forward -------------------------------------
def hyper_agg_forward(plan, dis_embedding, rel_embedding, params):
    D = EMBED_DIM
    R_pad = plan["R_pad"]

    # Static-row table: zeros except the dis / rel regions (built once per forward).
    init_tab = jnp.zeros((R_pad, D), jnp.float32)
    init_tab = init_tab.at[plan["DIS_OFF"]:plan["DIS_OFF"] + dis_embedding.shape[0]].set(
        dis_embedding.astype(jnp.float32))
    init_tab = init_tab.at[plan["REL_OFF"]:plan["REL_OFF"] + rel_embedding.shape[0]].set(
        rel_embedding.astype(jnp.float32))

    # Stack/cast per-layer weights once (layer-execution order).
    ws_stack = jnp.stack([params[t][k][0] for (t, k) in plan["wsel"]]).astype(jnp.float32)
    wt_stack = jnp.stack([params[t][k][1] for (t, k) in plan["wsel"]]).astype(jnp.float32)

    tab = fused_hyperagg(
        jnp.asarray(plan["out_off"]), jnp.asarray(plan["has_tgt"]),
        init_tab, jnp.asarray(plan["a_stack"]), ws_stack, wt_stack)

    # NOTE: subg_ent_emb.to(rel_embedding.dtype) is a no-op here (both f32).
    ent_emb   = tab[plan["ENT_OFF"]:plan["ENT_OFF"] + plan["subg_ent_num"]]
    hedge_emb = tab[plan["HEDGE_OFF"]:plan["HEDGE_OFF"] + plan["n_hedge"]]

    h_out       = hedge_emb[plan["src_hedge_rows"]]
    pos_ent_emb = ent_emb[plan["pos_subg_id"]]
    neg_ent_emb = ent_emb[plan["neg_subg_id"]]
    return h_out, pos_ent_emb, neg_ent_emb


# --------------------------------- main ----------------------------------------
if __name__ == "__main__":
    key = jax.random.PRNGKey(0)
    k_param, k_dis, k_rel = jax.random.split(key, 3)

    params = init_params(k_param)
    dis_embedding = jax.random.normal(k_dis, (NUM_DIS, EMBED_DIM), jnp.float32)
    rel_embedding = jax.random.normal(k_rel, (NUM_REL, EMBED_DIM), jnp.float32)

    # deterministic synthetic heterogeneous batch (the `batch_data` HeteroData)
    graph = {
        "node_x":            np.arange(N_V, dtype=np.int64),
        "v2e_src":           np.array([0, 1, 2, 3, 4, 5, 6, 7, 8, 9,
                                       0, 2, 4, 6, 8, 1, 3, 5], dtype=np.int64),
        "v2e_dst":           np.array([0, 0, 0, 1, 1, 1, 2, 2, 2, 3,
                                       3, 3, 4, 4, 4, 5, 5, 5], dtype=np.int64),
        "v2e_attr":          np.array([i % NUM_REL for i in range(18)], dtype=np.int64),
        "v_dis":             np.array([i % NUM_DIS for i in range(N_V)], dtype=np.int64),
        "source_hedge_mark": np.array([1, 1, 0, 0, 0, 0], dtype=np.int64),
        "pos_target_mark":   np.array([1, 0, 0, 1, 0, 0, 0, 0, 0, 0], dtype=np.int64),
        "neg_target_mark":   np.array([0, 0, 1, 0, 0, 1, 0, 0, 0, 0], dtype=np.int64),
        "batch_query_rel":   np.array([0, 3], dtype=np.int64),   # one per source hyperedge
    }

    plan = build_graph_plan(graph)   # host plumbing: once per graph, outside hot path

    h_out, pos_ent_emb, neg_ent_emb = hyper_agg_forward(
        plan, dis_embedding, rel_embedding, params)

    jax.block_until_ready(h_out)
    jax.block_until_ready(pos_ent_emb)
    jax.block_until_ready(neg_ent_emb)

    assert h_out.shape == (2, EMBED_DIM)
    assert pos_ent_emb.shape[1] == EMBED_DIM and neg_ent_emb.shape[1] == EMBED_DIM
    print("KERNEL_OK")
</pallas_src>

<mosaic_0001>
module attributes {stable_mosaic.version = 11 : i64} {
  func.func @_fused_hyperagg_kernel(%arg0: i32, %arg1: memref<5xi32, #tpu.memory_space<smem>>, %arg2: memref<5xi32, #tpu.memory_space<smem>>, %arg3: memref<48x32xf32, #tpu.memory_space<vmem>>, %arg4: memref<1x16x48xf32, #tpu.memory_space<vmem>>, %arg5: memref<1x32x32xf32, #tpu.memory_space<vmem>>, %arg6: memref<1x32x32xf32, #tpu.memory_space<vmem>>, %arg7: memref<48x32xf32, #tpu.memory_space<vmem>>, %arg8: memref<16x32xf32, #tpu.memory_space<vmem>>) attributes {dimension_semantics = [#tpu.dimension_semantics<arbitrary>], iteration_bounds = array<i64: 5>, scalar_prefetch = 2 : i64, scratch_operands = 1 : i64, tpu.core_type = #tpu.core_type<tc>, window_params = [{pipeline_mode = #tpu.pipeline_mode<synchronous>, transform_indices = @transform_0, window_bounds = array<i64: 48, 32>}, {transform_indices = @transform_1, window_bounds = array<i64: 1, 16, 48>}, {transform_indices = @transform_2, window_bounds = array<i64: 1, 32, 32>}, {transform_indices = @transform_3, window_bounds = array<i64: 1, 32, 32>}, {pipeline_mode = #tpu.pipeline_mode<synchronous>, transform_indices = @transform_4, window_bounds = array<i64: 48, 32>}]} {
    %c0_i32 = arith.constant 0 : i32
    %0 = arith.cmpi eq, %arg0, %c0_i32 : i32
    %1 = arith.extui %0 : i1 to i32
    %c0_i32_0 = arith.constant 0 : i32
    %2 = arith.cmpi ne, %1, %c0_i32_0 : i32
    scf.if %2 {
      %c0_16 = arith.constant 0 : index
      %c0_17 = arith.constant 0 : index
      %24 = vector.load %arg3[%c0_16, %c0_17] : memref<48x32xf32, #tpu.memory_space<vmem>>, vector<48x32xf32>
      %c0_18 = arith.constant 0 : index
      %c0_19 = arith.constant 0 : index
      %25 = vector.load %arg7[%c0_18, %c0_19] : memref<48x32xf32, #tpu.memory_space<vmem>>, vector<48x32xf32>
      tpu.vector_store %arg7[%c0_18, %c0_19], %24 {strides = array<i32>} : memref<48x32xf32, #tpu.memory_space<vmem>>, vector<48x32xf32>,
    } else {
    }
    %c0 = arith.constant 0 : index
    %c0_1 = arith.constant 0 : index
    %c0_2 = arith.constant 0 : index
    %3 = vector.load %arg4[%c0, %c0_1, %c0_2] : memref<1x16x48xf32, #tpu.memory_space<vmem>>, vector<1x16x48xf32>
    %4 = vector.shape_cast %3 : vector<1x16x48xf32> to vector<16x48xf32>
    %c0_3 = arith.constant 0 : index
    %c0_4 = arith.constant 0 : index
    %5 = vector.load %arg7[%c0_3, %c0_4] : memref<48x32xf32, #tpu.memory_space<vmem>>, vector<48x32xf32>
    %cst = arith.constant dense<0.000000e+00> : vector<16x32xf32>
    %6 = tpu.matmul %4, %5, %cst {dimension_numbers = #tpu.dot_dimension_numbers<[1], [0], [0], [1], [0, 0, 1, 1], [], []>} : vector<16x48xf32>, vector<48x32xf32>, vector<16x32xf32> -> vector<16x32xf32>
    %c0_5 = arith.constant 0 : index
    %c0_6 = arith.constant 0 : index
    %c0_7 = arith.constant 0 : index
    %7 = vector.load %arg5[%c0_5, %c0_6, %c0_7] : memref<1x32x32xf32, #tpu.memory_space<vmem>>, vector<1x32x32xf32>
    %8 = vector.shape_cast %7 : vector<1x32x32xf32> to vector<32x32xf32>
    %cst_8 = arith.constant dense<0.000000e+00> : vector<16x32xf32>
    %9 = tpu.matmul %6, %8, %cst_8 {dimension_numbers = #tpu.dot_dimension_numbers<[1], [0], [0], [1], [0, 0, 1, 1], [], []>} : vector<16x32xf32>, vector<32x32xf32>, vector<16x32xf32> -> vector<16x32xf32>
    %c0_9 = arith.constant 0 : index
    %c0_10 = arith.constant 0 : index
    %10 = vector.load %arg8[%c0_9, %c0_10] : memref<16x32xf32, #tpu.memory_space<vmem>>, vector<16x32xf32>
    tpu.vector_store %arg8[%c0_9, %c0_10], %9 {strides = array<i32>} : memref<16x32xf32, #tpu.memory_space<vmem>>, vector<16x32xf32>,
    %11 = arith.index_cast %arg0 : i32 to index
    %12 = memref.load %arg1[%11] : memref<5xi32, #tpu.memory_space<smem>>
    %13 = tpu.assume_multiple %12, 8 : i32
    %14 = arith.index_cast %arg0 : i32 to index
    %15 = memref.load %arg2[%14] : memref<5xi32, #tpu.memory_space<smem>>
    %c1_i32 = arith.constant 1 : i32
    %16 = arith.cmpi eq, %15, %c1_i32 : i32
    %17 = arith.extui %16 : i1 to i32
    %c0_i32_11 = arith.constant 0 : i32
    %18 = arith.cmpi ne, %17, %c0_i32_11 : i32
    scf.if %18 {
      %cst_16 = arith.constant dense<0.000000e+00> : vector<16xf32>
      %24 = vector.multi_reduction <add>, %4, %cst_16 [1] : vector<16x48xf32> to vector<16xf32>
      %25 = vector.shape_cast %24 : vector<16xf32> to vector<16x1xf32>
      %cst_17 = arith.constant 5.000000e-01 : f32
      %26 = vector.broadcast %cst_17 : f32 to vector<16x1xf32>
      %27 = arith.cmpf ogt, %25, %26 : vector<16x1xf32>
      %cst_18 = arith.constant 1.000000e+00 : f32
      %cst_19 = arith.constant 0.000000e+00 : f32
      %28 = vector.broadcast %cst_18 : f32 to vector<16x1xf32>
      %29 = vector.broadcast %cst_19 : f32 to vector<16x1xf32>
      %30 = arith.select %27, %28, %29 : vector<16x1xi1>, vector<16x1xf32>
      %31 = arith.index_cast %13 : i32 to index
      %c0_20 = arith.constant 0 : index
      %32 = vector.load %arg7[%31, %c0_20] : memref<48x32xf32, #tpu.memory_space<vmem>>, vector<16x32xf32>
      %c0_21 = arith.constant 0 : index
      %c0_22 = arith.constant 0 : index
      %33 = vector.load %arg8[%c0_21, %c0_22] : memref<16x32xf32, #tpu.memory_space<vmem>>, vector<16x32xf32>
      %34 = vector.broadcast %30 : vector<16x1xf32> to vector<16x32xf32>
      %35 = arith.mulf %32, %34 : vector<16x32xf32>
      %c0_23 = arith.constant 0 : index
      %c0_24 = arith.constant 0 : index
      %c0_25 = arith.constant 0 : index
      %36 = vector.load %arg6[%c0_23, %c0_24, %c0_25] : memref<1x32x32xf32, #tpu.memory_space<vmem>>, vector<1x32x32xf32>
      %37 = vector.shape_cast %36 : vector<1x32x32xf32> to vector<32x32xf32>
      %cst_26 = arith.constant dense<0.000000e+00> : vector<16x32xf32>
      %38 = tpu.matmul %35, %37, %cst_26 {dimension_numbers = #tpu.dot_dimension_numbers<[1], [0], [0], [1], [0, 0, 1, 1], [], []>} : vector<16x32xf32>, vector<32x32xf32>, vector<16x32xf32> -> vector<16x32xf32>
      %39 = arith.addf %33, %38 : vector<16x32xf32>
      %c0_27 = arith.constant 0 : index
      %c0_28 = arith.constant 0 : index
      %40 = vector.load %arg8[%c0_27, %c0_28] : memref<16x32xf32, #tpu.memory_space<vmem>>, vector<16x32xf32>
      tpu.vector_store %arg8[%c0_27, %c0_28], %39 {strides = array<i32>} : memref<16x32xf32, #tpu.memory_space<vmem>>, vector<16x32xf32>,
    } else {
    }
    %c0_12 = arith.constant 0 : index
    %c0_13 = arith.constant 0 : index
    %19 = vector.load %arg8[%c0_12, %c0_13] : memref<16x32xf32, #tpu.memory_space<vmem>>, vector<16x32xf32>
    %cst_14 = arith.constant 0.000000e+00 : f32
    %20 = vector.broadcast %cst_14 : f32 to vector<16x32xf32>
    %21 = arith.maximumf %19, %20 : vector<16x32xf32>
    %22 = arith.index_cast %13 : i32 to index
    %c0_15 = arith.constant 0 : index
    %23 = vector.load %arg7[%22, %c0_15] : memref<48x32xf32, #tpu.memory_space<vmem>>, vector<16x32xf32>
    tpu.vector_store %arg7[%22, %c0_15], %21 {strides = array<i32>} : memref<48x32xf32, #tpu.memory_space<vmem>>, vector<16x32xf32>,
    return
  }
  func.func @transform_0(%arg0: i32, %arg1: memref<5xi32, #tpu.memory_space<smem>>, %arg2: memref<5xi32, #tpu.memory_space<smem>>) -> (i32, i32) {
    %c0_i32 = arith.constant 0 : i32
    %c0_i32_0 = arith.constant 0 : i32
    %c0_i32_1 = arith.constant 0 : i32
    return %c0_i32, %c0_i32_0 : i32, i32
  }
  func.func @transform_1(%arg0: i32, %arg1: memref<5xi32, #tpu.memory_space<smem>>, %arg2: memref<5xi32, #tpu.memory_space<smem>>) -> (i32, i32, i32) {
    %c0_i32 = arith.constant 0 : i32
    %c0_i32_0 = arith.constant 0 : i32
    %c0_i32_1 = arith.constant 0 : i32
    return %arg0, %c0_i32, %c0_i32_0 : i32, i32, i32
  }
  func.func @transform_2(%arg0: i32, %arg1: memref<5xi32, #tpu.memory_space<smem>>, %arg2: memref<5xi32, #tpu.memory_space<smem>>) -> (i32, i32, i32) {
    %c0_i32 = arith.constant 0 : i32
    %c0_i32_0 = arith.constant 0 : i32
    %c0_i32_1 = arith.constant 0 : i32
    return %arg0, %c0_i32, %c0_i32_0 : i32, i32, i32
  }
  func.func @transform_3(%arg0: i32, %arg1: memref<5xi32, #tpu.memory_space<smem>>, %arg2: memref<5xi32, #tpu.memory_space<smem>>) -> (i32, i32, i32) {
    %c0_i32 = arith.constant 0 : i32
    %c0_i32_0 = arith.constant 0 : i32
    %c0_i32_1 = arith.constant 0 : i32
    return %arg0, %c0_i32, %c0_i32_0 : i32, i32, i32
  }
  func.func @transform_4(%arg0: i32, %arg1: memref<5xi32, #tpu.memory_space<smem>>, %arg2: memref<5xi32, #tpu.memory_space<smem>>) -> (i32, i32) {
    %c0_i32 = arith.constant 0 : i32
    %c0_i32_0 = arith.constant 0 : i32
    %c0_i32_1 = arith.constant 0 : i32
    return %c0_i32, %c0_i32_0 : i32, i32
  }
}

</mosaic_0001>

<llo_original>
// kernel: tpu_custom_call.1
$region0: #{tpu_custom_call.1}
  #allocation0 [shape = 'u32[]', space=smem, size = 0x4, offset = 0x4, fixed_abs, tag = 'smem constant byte address 0x4 - core index']
  #allocation1 [shape = 'u32[72,128]{1,0:T(1,128)}', space=vmem, size = 0x9000, scoped, tag = 'internal scratch']
  #allocation2 [shape = 'f32[16,32]{1,0:T(8,128)}', space=vmem, size = 0x2000, scoped, tag = 'scratch operand']
  #allocation3 [shape = 's32[1]{0}', space=sflag, size = 0x4, scoped, tag = 'scoped memory for tpu_custom_call.1']
  #allocation4 [shape = 'u8[512]{0}', space=smem, size = 0x200, scoped, tag = 'prefetched SMEM operand 0']
  #allocation5 [shape = 'u8[512]{0}', space=smem, size = 0x200, scoped, tag = 'prefetched SMEM operand 1']
  %s0 = inlined_call_operand.vmem [shape: s32[5], index: 0, kind: input, shape index: {}]
  %s1 = inlined_call_operand.vmem [shape: s32[5], index: 1, kind: input, shape index: {}]
  %s2 = inlined_call_operand.vmem [shape: f32[48,32], index: 2, kind: input, shape index: {}]
  %s3 = inlined_call_operand.vmem [shape: f32[5,16,48], index: 3, kind: input, shape index: {}]
  %s4 = inlined_call_operand.hbm [shape: f32[5,32,32], index: 4, kind: input, shape index: {}]
  %s5 = inlined_call_operand.hbm [shape: f32[5,32,32], index: 5, kind: input, shape index: {}]
  %s6 = inlined_call_operand.vmem [shape: f32[48,32], index: 6, kind: output, shape index: {}]
  %s7 = sld [smem:[#allocation0]]
  $region65: #{tpu_custom_call.1} parent=0
    _
  %s9 = ssub.s32 1, %s7
  %s10 = scalar_select 0, %s9, %s7
  %s12 = sshll.u32 %s0, 4
  %s13 = int_to_ptr.vmem [resolvable:$true] %s12
  %15 = dma.vmem_to_smem %s13, 16, [#allocation4], [#allocation3]
  %s17 = sshll.u32 %s1, 4
  %s18 = int_to_ptr.vmem [resolvable:$true] %s17
  %20 = dma.vmem_to_smem %s18, 16, [#allocation5], [#allocation3]
  %22 = dma.done [#allocation3], 32
  %23 = sfence
  $region1: #{tpu_custom_call.1} parent=0
    #allocation6 [shape = 'u8[32768]{0}', space=vmem, size = 0x8000, scoped, tag = 'input window, operand 4']
    #allocation7 [shape = 's32[2]{0}', space=sflag, size = 0x8, scoped, tag = 'scoped memory for tpu_custom_call.1']
    #allocation8 [shape = 'u8[32768]{0}', space=vmem, size = 0x8000, scoped, tag = 'input window, operand 5']
    #allocation9 [shape = 's32[2]{0}', space=sflag, size = 0x8, scoped, tag = 'scoped memory for tpu_custom_call.1']
    %24 = vsyncpa [#allocation7], 0
    %s25 = scalar_lea.sflag [#allocation7], 1
    %26 = vsyncpa %s25, 0
    %27 = vsyncpa [#allocation9], 0
    %s28 = scalar_lea.sflag [#allocation9], 1
    %29 = vsyncpa %s28, 0
    loop: start=0, step=1, limit=7
    $region2: #{tpu_custom_call.1} parent=1 // loop_pre_header
      _
    $region3: #{tpu_custom_call.1} parent=1 // loop_header
      %s31 = sphi 0, %s35
      %p32 = scmp.ge.s32.totalorder %s31, 7
      %s39 = sphi 0, %s39
      %s41 = sphi 0, %s39
      %s42 = sphi 0, %s41
      %s56 = sphi 0, %s42
      %s62 = sphi 0, %s64
      %s65 = sphi 0, %s62
      %s66 = sphi 0, %s65
      %s82 = sphi 0, %s66
      %s88 = sphi 0, %s90
      %s91 = sphi 0, %s88
      %s92 = sphi 0, %s91
      %s108 = sphi 0, %s92
      %s114 = sphi 0, %s116
      %s117 = sphi 0, %s114
      %s118 = sphi 0, %s117
      %s134 = sphi 0, %s118
      %s138 = sphi 0, %s138
      %s140 = sphi 0, %s138
      %s141 = sphi 0, %s140
      %s155 = sphi 0, %s141
    $region4: #{tpu_custom_call.1} parent=1 // loop_header_branch
      %34 = sbr.rel (%p32) target = $region8
    $region5: #{tpu_custom_call.1} parent=1 // loop_body
      %s36 = ssub.s32 %s31, 1
      %s37 = ssub.s32 %s31, 2
      %s38 = sadd.s32 %s31, 1
      %s40 = sadd.s32 %s39, 1
      %p43 = scmp.eq.s32.totalorder %s31, 4
      %p44 = scmp.ne.s32.totalorder %s39, %s41
      %p45 = scmp.eq.s32.totalorder %s31, 0
      %p46 = por %p44, %p45
      %p47 = scmp.ne.s32.totalorder %s39, %s41
      %p48 = scmp.eq.s32.totalorder %s36, 4
      %p49 = por %p47, %p48
      %p50 = scmp.ne.s32.totalorder %s41, %s42
      %p51 = scmp.eq.s32.totalorder %s36, 0
      %p52 = por %p50, %p51
      %p53 = scmp.ne.s32.totalorder %s41, %s42
      %p54 = scmp.eq.s32.totalorder %s37, 4
      %p55 = por %p53, %p54
      %p57 = scmp.ne.s32.totalorder %s42, %s56
      %p58 = scmp.eq.s32.totalorder %s37, 0
      %p59 = por %p57, %p58
      %s60 = ssub.s32 %s31, %s38
      %p61 = scmp.eq.s32.totalorder %s60, 0
      %s63 = sadd.s32 %s62, 1
      %s64 = scalar_select %p61, %s62, %s63
      %p67 = pneg %p61
      %p68 = scmp.eq.s32.totalorder %s31, 4
      %p69 = por %p67, %p68
      %p70 = scmp.ne.s32.totalorder %s62, %s65
      %p71 = scmp.eq.s32.totalorder %s31, 0
      %p72 = por %p70, %p71
      %p73 = scmp.ne.s32.totalorder %s62, %s65
      %p74 = scmp.eq.s32.totalorder %s36, 4
      %p75 = por %p73, %p74
      %p76 = scmp.ne.s32.totalorder %s65, %s66
      %p77 = scmp.eq.s32.totalorder %s36, 0
      %p78 = por %p76, %p77
      %p79 = scmp.ne.s32.totalorder %s65, %s66
      %p80 = scmp.eq.s32.totalorder %s37, 4
      %p81 = por %p79, %p80
      %p83 = scmp.ne.s32.totalorder %s66, %s82
      %p84 = scmp.eq.s32.totalorder %s37, 0
      %p85 = por %p83, %p84
      %s86 = ssub.s32 %s31, %s38
      %p87 = scmp.eq.s32.totalorder %s86, 0
      %s89 = sadd.s32 %s88, 1
      %s90 = scalar_select %p87, %s88, %s89
      %p93 = pneg %p87
      %p94 = scmp.eq.s32.totalorder %s31, 4
      %p95 = por %p93, %p94
      %p96 = scmp.ne.s32.totalorder %s88, %s91
      %p97 = scmp.eq.s32.totalorder %s31, 0
      %p98 = por %p96, %p97
      %p99 = scmp.ne.s32.totalorder %s88, %s91
      %p100 = scmp.eq.s32.totalorder %s36, 4
      %p101 = por %p99, %p100
      %p102 = scmp.ne.s32.totalorder %s91, %s92
      %p103 = scmp.eq.s32.totalorder %s36, 0
      %p104 = por %p102, %p103
      %p105 = scmp.ne.s32.totalorder %s91, %s92
      %p106 = scmp.eq.s32.totalorder %s37, 4
      %p107 = por %p105, %p106
      %p109 = scmp.ne.s32.totalorder %s92, %s108
      %p110 = scmp.eq.s32.totalorder %s37, 0
      %p111 = por %p109, %p110
      %s112 = ssub.s32 %s31, %s38
      %p113 = scmp.eq.s32.totalorder %s112, 0
      %s115 = sadd.s32 %s114, 1
      %s116 = scalar_select %p113, %s114, %s115
      %p119 = pneg %p113
      %p120 = scmp.eq.s32.totalorder %s31, 4
      %p121 = por %p119, %p120
      %p122 = scmp.ne.s32.totalorder %s114, %s117
      %p123 = scmp.eq.s32.totalorder %s31, 0
      %p124 = por %p122, %p123
      %p125 = scmp.ne.s32.totalorder %s114, %s117
      %p126 = scmp.eq.s32.totalorder %s36, 4
      %p127 = por %p125, %p126
      %p128 = scmp.ne.s32.totalorder %s117, %s118
      %p129 = scmp.eq.s32.totalorder %s36, 0
      %p130 = por %p128, %p129
      %p131 = scmp.ne.s32.totalorder %s117, %s118
      %p132 = scmp.eq.s32.totalorder %s37, 4
      %p133 = por %p131, %p132
      %p135 = scmp.ne.s32.totalorder %s118, %s134
      %p136 = scmp.eq.s32.totalorder %s37, 0
      %p137 = por %p135, %p136
      %s139 = sadd.s32 %s138, 1
      %p142 = scmp.eq.s32.totalorder %s31, 4
      %p143 = scmp.ne.s32.totalorder %s138, %s140
      %p144 = scmp.eq.s32.totalorder %s31, 0
      %p145 = por %p143, %p144
      %p146 = scmp.ne.s32.totalorder %s138, %s140
      %p147 = scmp.eq.s32.totalorder %s36, 4
      %p148 = por %p146, %p147
      %p149 = scmp.ne.s32.totalorder %s140, %s141
      %p150 = scmp.eq.s32.totalorder %s36, 0
      %p151 = por %p149, %p150
      %p152 = scmp.ne.s32.totalorder %s140, %s141
      %p153 = scmp.eq.s32.totalorder %s37, 4
      %p154 = por %p152, %p153
      %p156 = scmp.ne.s32.totalorder %s141, %s155
      %p157 = scmp.eq.s32.totalorder %s37, 0
      %p158 = por %p156, %p157
      %p159 = scmp.le.s32.totalorder 1, %s31
      %p160 = scmp.lt.s32.totalorder %s31, 6
      %p161 = pnand %p159, %p160
      %p162 = pneg %p161
      // Predicated region
      $region9: #{tpu_custom_call.1} parent=5 // pred_check
        _
      $region10: #{tpu_custom_call.1} parent=5 // pred_check_branch
        %164 = sbr.rel (%p161) target = $region12
      $region11: #{tpu_custom_call.1} parent=5 // pred_region
        %s165 = ssub.s32 %s31, 1
        // Predicated region
        $region13: #{tpu_custom_call.1} parent=11 // pred_check
          %p166 = pneg %p52
        $region14: #{tpu_custom_call.1} parent=11 // pred_check_branch
          %168 = sbr.rel (%p166) target = $region16
        $region15: #{tpu_custom_call.1} parent=11 // pred_region
          _
        $region16: #{tpu_custom_call.1} parent=11 // pred_fallthru
          _
      $region12: #{tpu_custom_call.1} parent=5 // pred_fallthru
        _
      %p169 = scmp.lt.s32.totalorder %s31, 5
      // Predicated region
      $region17: #{tpu_custom_call.1} parent=5 // pred_check
        %p170 = pneg %p169
      $region18: #{tpu_custom_call.1} parent=5 // pred_check_branch
        %172 = sbr.rel (%p170) target = $region20
      $region19: #{tpu_custom_call.1} parent=5 // pred_region
        // Predicated region
        $region21: #{tpu_custom_call.1} parent=19 // pred_check
          %p173 = pneg %p72
        $region22: #{tpu_custom_call.1} parent=19 // pred_check_branch
          %175 = sbr.rel (%p173) target = $region24
        $region23: #{tpu_custom_call.1} parent=19 // pred_region
          %p176 = scmp.lt.s32.totalorder %s31, 4
          %s177 = scalar_select %p176, %s31, 4
          %s178 = smul.addr %s177, 2
          %s179 = smul.addr %s178, 8
          %s180 = scalar_lea.vmem %s3, %s179
        $region24: #{tpu_custom_call.1} parent=19 // pred_fallthru
          _
        // Predicated region
        $region25: #{tpu_custom_call.1} parent=19 // pred_check
          %p181 = pneg %p98
        $region26: #{tpu_custom_call.1} parent=19 // pred_check_branch
          %183 = sbr.rel (%p181) target = $region28
        $region27: #{tpu_custom_call.1} parent=19 // pred_region
          %s184 = sand.u32 %s88, 1
          %s185 = scalar_lea.sflag [#allocation7], %s184
          %s186 = sand.u32 %s88, 1
          %s187 = smul.addr %s186, 32
          %s188 = scalar_lea.vmem [#allocation6], %s187
          %190 = vsyncadd %s185, 0
          %s191 = smul.addr %s31, 4
          %s192 = smul.addr %s191, 8
          %s193 = scalar_lea.hbm %s4, %s192
          %s194 = sshll.u32 %s193, 4
          %s195 = int_to_ptr.hbm [resolvable:$true] %s194
          %s196 = sshll.u32 %s188, 4
          %s197 = int_to_ptr.vmem [resolvable:$true] %s196
          %202 = dma.hbm_to_vmem [thread:$0]  %s195, 512, %s197, %s185, 128, 128, 8
        $region28: #{tpu_custom_call.1} parent=19 // pred_fallthru
          _
        // Predicated region
        $region29: #{tpu_custom_call.1} parent=19 // pred_check
          %p203 = pneg %p124
        $region30: #{tpu_custom_call.1} parent=19 // pred_check_branch
          %205 = sbr.rel (%p203) target = $region32
        $region31: #{tpu_custom_call.1} parent=19 // pred_region
          %s206 = sand.u32 %s114, 1
          %s207 = scalar_lea.sflag [#allocation9], %s206
          %s208 = sand.u32 %s114, 1
          %s209 = smul.addr %s208, 32
          %s210 = scalar_lea.vmem [#allocation8], %s209
          %212 = vsyncadd %s207, 0
          %s213 = smul.addr %s31, 4
          %s214 = smul.addr %s213, 8
          %s215 = scalar_lea.hbm %s5, %s214
          %s216 = sshll.u32 %s215, 4
          %s217 = int_to_ptr.hbm [resolvable:$true] %s216
          %s218 = sshll.u32 %s210, 4
          %s219 = int_to_ptr.vmem [resolvable:$true] %s218
          %224 = dma.hbm_to_vmem [thread:$0]  %s217, 512, %s219, %s207, 128, 128, 8
        $region32: #{tpu_custom_call.1} parent=19 // pred_fallthru
          _
      $region20: #{tpu_custom_call.1} parent=5 // pred_fallthru
        _
      %p225 = scmp.le.s32.totalorder 1, %s31
      %p226 = scmp.lt.s32.totalorder %s31, 6
      %p227 = pnand %p225, %p226
      %p228 = pneg %p227
      // Predicated region
      $region33: #{tpu_custom_call.1} parent=5 // pred_check
        _
      $region34: #{tpu_custom_call.1} parent=5 // pred_check_branch
        %230 = sbr.rel (%p227) target = $region36
      $region35: #{tpu_custom_call.1} parent=5 // pred_region
        %s231 = ssub.s32 %s31, 1
        %s232 = sand.u32 %s91, 1
        %s233 = scalar_lea.sflag [#allocation7], %s232
        %s234 = sand.u32 %s91, 1
        %s235 = smul.addr %s234, 32
        %s236 = scalar_lea.vmem [#allocation6], %s235
        // Predicated region
        $region37: #{tpu_custom_call.1} parent=35 // pred_check
          %p237 = pneg %p104
        $region38: #{tpu_custom_call.1} parent=35 // pred_check_branch
          %239 = sbr.rel (%p237) target = $region40
        $region39: #{tpu_custom_call.1} parent=35 // pred_region
          %241 = dma.done %s233, 512
        $region40: #{tpu_custom_call.1} parent=35 // pred_fallthru
          _
        %s242 = sand.u32 %s117, 1
        %s243 = scalar_lea.sflag [#allocation9], %s242
        %s244 = sand.u32 %s117, 1
        %s245 = smul.addr %s244, 32
        %s246 = scalar_lea.vmem [#allocation8], %s245
        // Predicated region
        $region41: #{tpu_custom_call.1} parent=35 // pred_check
          %p247 = pneg %p130
        $region42: #{tpu_custom_call.1} parent=35 // pred_check_branch
          %249 = sbr.rel (%p247) target = $region44
        $region43: #{tpu_custom_call.1} parent=35 // pred_region
          %251 = dma.done %s243, 512
        $region44: #{tpu_custom_call.1} parent=35 // pred_fallthru
          _
        %p252 = pneg %p52
        %p253 = pneg %p49
        %p254 = scmp.lt.s32.totalorder %s36, 4
        %s255 = scalar_select %p254, %s36, 4
        %s256 = smul.addr %s255, 2
        %s257 = smul.addr %s256, 8
        %s258 = scalar_lea.vmem %s3, %s257
        %p259 = pneg %p78
        %p260 = pneg %p75
        %s261 = sand.u32 %s91, 1
        %s262 = scalar_lea.sflag [#allocation7], %s261
        %s263 = sand.u32 %s91, 1
        %s264 = smul.addr %s263, 32
        %s265 = scalar_lea.vmem [#allocation6], %s264
        %p266 = pneg %p104
        %p267 = pneg %p101
        %s268 = sand.u32 %s117, 1
        %s269 = scalar_lea.sflag [#allocation9], %s268
        %s270 = sand.u32 %s117, 1
        %s271 = smul.addr %s270, 32
        %s272 = scalar_lea.vmem [#allocation8], %s271
        %p273 = pneg %p130
        %p274 = pneg %p127
        %p275 = pneg %p151
        %p276 = pneg %p148
        %p277 = scmp.lt.s32.totalorder %s36, 4
        %s278 = scalar_select %p277, %s36, 4
        %s279 = smul.addr %s278, 2
        %s280 = smul.addr %s279, 8
        %s281 = scalar_lea.vmem %s3, %s280
        %p282 = scmp.eq.s32.totalorder %s36, 0
        // Predicated region
        $region45: #{tpu_custom_call.1} parent=35 // pred_check
          %p283 = pneg %p282
        $region46: #{tpu_custom_call.1} parent=35 // pred_check_branch
          %285 = sbr.rel (%p283) target = $region48
        $region47: #{tpu_custom_call.1} parent=35 // pred_region
          %v286 = vld [vmem:[%s2] sm:$0xff]
          %v287 = vld [vmem:[%s2 + $0x8] sm:$0xff]
          %v288 = vld [vmem:[%s2 + $0x10] sm:$0xff]
          %v289 = vld [vmem:[%s2 + $0x18] sm:$0xff]
          %v290 = vld [vmem:[%s2 + $0x20] sm:$0xff]
          %v291 = vld [vmem:[%s2 + $0x28] sm:$0xff]
          %vm292 = vcmask 261120
          %293 = vst.msk [vmem:[%s6] sm:$0xff] %vm292, %v286
          %294 = vst.msk [vmem:[%s6 + $0x8] sm:$0xff] %vm292, %v287
          %295 = vst.msk [vmem:[%s6 + $0x10] sm:$0xff] %vm292, %v288
          %296 = vst.msk [vmem:[%s6 + $0x18] sm:$0xff] %vm292, %v289
          %297 = vst.msk [vmem:[%s6 + $0x20] sm:$0xff] %vm292, %v290
          %298 = vst.msk [vmem:[%s6 + $0x28] sm:$0xff] %vm292, %v291
        $region48: #{tpu_custom_call.1} parent=35 // pred_fallthru
          _
        %v299 = vld [vmem:[%s281] sm:$0xff]
        %v300 = vld [vmem:[%s281 + $0x8] sm:$0xff]
        %v301 = vld [vmem:[%s6] sm:$0xff]
        %v302 = vld [vmem:[%s6 + $0x8] sm:$0xff]
        %v303 = vld [vmem:[%s6 + $0x10] sm:$0xff]
        %v304 = vld [vmem:[%s6 + $0x18] sm:$0xff]
        %v305 = vld [vmem:[%s6 + $0x20] sm:$0xff]
        %v306 = vld [vmem:[%s6 + $0x28] sm:$0xff]
        %vm307 = vcmask 392192
        %v309 = vsel %vm307, %v299, 0
        %v312 = vsel %vm307, %v300, 0
        %314 = vmatpush.msra.mxu0 0.0
        %315 = vmatpush.msra.mxu0 0.0
        %316 = vmatpush.msra.mxu0 0.0
        %317 = vmatpush.msra.mxu0 0.0
        %318 = vmatpush.msra.mxu0 0.0
        %319 = vmatpush.msra.mxu0 0.0
        %320 = vmatpush.msra.mxu0 0.0
        %321 = vmatpush.msra.mxu0 0.0
        %322 = vmatpush.msra.mxu0 0.0
        %323 = vmatpush.msra.mxu0 0.0
        %324 = vmatpush.msra.mxu0 %v306
        %325 = vmatpush.msra.mxu0 %v305
        %326 = vmatpush.msra.mxu0 %v304
        %327 = vmatpush.msra.mxu0 %v303
        %328 = vmatpush.msra.mxu0 %v302
        %329 = vmatpush.msra.mxu0 %v301
        %330 = vmatmul.f32.gmra.mxu0 %v309
        %v331 = vpop.f32.mrf.mxu0
        %v332 = vadd.f32 0.0, %v331
        %333 = vmatmul.f32.gmra.mxu0 %v312
        %v334 = vpop.f32.mrf.mxu0
        %v335 = vadd.f32 0.0, %v334
        %336 = vdwg.mxu0
        %v337 = vld [vmem:[%s236] sm:$0xff]
        %v338 = vld [vmem:[%s236 + $0x8] sm:$0xff]
        %v339 = vld [vmem:[%s236 + $0x10] sm:$0xff]
        %v340 = vld [vmem:[%s236 + $0x18] sm:$0xff]
        %vm341 = vcmask 261120
        %v343 = vsel %vm341, %v332, 0
        %v346 = vsel %vm341, %v335, 0
        %348 = vmatpush.msra.mxu0 0.0
        %349 = vmatpush.msra.mxu0 0.0
        %350 = vmatpush.msra.mxu0 0.0
        %351 = vmatpush.msra.mxu0 0.0
        %352 = vmatpush.msra.mxu0 0.0
        %353 = vmatpush.msra.mxu0 0.0
        %354 = vmatpush.msra.mxu0 0.0
        %355 = vmatpush.msra.mxu0 0.0
        %356 = vmatpush.msra.mxu0 0.0
        %357 = vmatpush.msra.mxu0 0.0
        %358 = vmatpush.msra.mxu0 0.0
        %359 = vmatpush.msra.mxu0 0.0
        %360 = vmatpush.msra.mxu0 %v340
        %361 = vmatpush.msra.mxu0 %v339
        %362 = vmatpush.msra.mxu0 %v338
        %363 = vmatpush.msra.mxu0 %v337
        %364 = vmatmul.f32.gmra.mxu0 %v343
        %v365 = vpop.f32.mrf.mxu0
        %v366 = vadd.f32 0.0, %v365
        %367 = vmatmul.f32.gmra.mxu0 %v346
        %v368 = vpop.f32.mrf.mxu0
        %v369 = vadd.f32 0.0, %v368
        %370 = vdwg.mxu0
        %371 = vst.msk [vmem:[#allocation2] sm:$0xff] %vm341, %v366
        %372 = vst.msk [vmem:[#allocation2 + $0x8] sm:$0xff] %vm341, %v369
        %s373 = sld [smem:[#allocation4 + %s36]]
        %s374 = sld [smem:[#allocation5 + %s36]]
        %p375 = scmp.eq.s32.totalorder %s374, 1
        // Predicated region
        $region49: #{tpu_custom_call.1} parent=35 // pred_check
          %p376 = pneg %p375
        $region50: #{tpu_custom_call.1} parent=35 // pred_check_branch
          %378 = sbr.rel (%p376) target = $region52
        $region51: #{tpu_custom_call.1} parent=35 // pred_region
          %v379 = vsel %vm307, %v299, 0.0
          %380 = vadd.xlane.f32.xlu0 %v379
          %v381 = vpop.xlane.xlu0 %380
          %v382 = vsel %vm307, %v300, 0.0
          %383 = vadd.xlane.f32.xlu0 %v382
          %v384 = vpop.xlane.xlu0 %383
          %vm385 = vcmp.gt.f32.partialorder %v381, 0.5
          %vm386 = vcmp.gt.f32.partialorder %v384, 0.5
          %v387 = vsel %vm385, 1.0, 0.0
          %v388 = vsel %vm386, 1.0, 0.0
          %s389 = scalar_lea.vmem %s6, %s373
          %v390 = vld [vmem:[%s389] sm:$0xff]
          %v391 = vld [vmem:[%s389 + $0x8] sm:$0xff]
          %v392 = vld [vmem:[#allocation2] sm:$0xff]
          %v393 = vld [vmem:[#allocation2 + $0x8] sm:$0xff]
          %v394 = vmul.f32 %v390, %v387
          %v395 = vmul.f32 %v391, %v388
          %v396 = vld [vmem:[%s246] sm:$0xff]
          %v397 = vld [vmem:[%s246 + $0x8] sm:$0xff]
          %v398 = vld [vmem:[%s246 + $0x10] sm:$0xff]
          %v399 = vld [vmem:[%s246 + $0x18] sm:$0xff]
          %v401 = vsel %vm341, %v394, 0
          %v404 = vsel %vm341, %v395, 0
          %406 = vmatpush.msra.mxu0 0.0
          %407 = vmatpush.msra.mxu0 0.0
          %408 = vmatpush.msra.mxu0 0.0
          %409 = vmatpush.msra.mxu0 0.0
          %410 = vmatpush.msra.mxu0 0.0
          %411 = vmatpush.msra.mxu0 0.0
          %412 = vmatpush.msra.mxu0 0.0
          %413 = vmatpush.msra.mxu0 0.0
          %414 = vmatpush.msra.mxu0 0.0
          %415 = vmatpush.msra.mxu0 0.0
          %416 = vmatpush.msra.mxu0 0.0
          %417 = vmatpush.msra.mxu0 0.0
          %418 = vmatpush.msra.mxu0 %v399
          %419 = vmatpush.msra.mxu0 %v398
          %420 = vmatpush.msra.mxu0 %v397
          %421 = vmatpush.msra.mxu0 %v396
          %422 = vmatmul.f32.gmra.mxu0 %v401
          %v423 = vpop.f32.mrf.mxu0
          %v424 = vadd.f32 0.0, %v423
          %425 = vmatmul.f32.gmra.mxu0 %v404
          %v426 = vpop.f32.mrf.mxu0
          %v427 = vadd.f32 0.0, %v426
          %428 = vdwg.mxu0
          %v429 = vadd.f32 %v392, %v424
          %v430 = vadd.f32 %v393, %v427
          %431 = vst.msk [vmem:[#allocation2] sm:$0xff] %vm341, %v429
          %432 = vst.msk [vmem:[#allocation2 + $0x8] sm:$0xff] %vm341, %v430
        $region52: #{tpu_custom_call.1} parent=35 // pred_fallthru
          _
        %v433 = vld [vmem:[#allocation2] sm:$0xff]
        %v434 = vld [vmem:[#allocation2 + $0x8] sm:$0xff]
        %v435 = vmax.f32 %v433, 0.0
        %v436 = vmax.f32 %v434, 0.0
        %s437 = scalar_lea.vmem %s6, %s373
        %438 = vst.msk [vmem:[%s437] sm:$0xff] %vm341, %v435
        %439 = vst.msk [vmem:[%s437 + $0x8] sm:$0xff] %vm341, %v436
        // Predicated region
        $region53: #{tpu_custom_call.1} parent=35 // pred_check
          %p440 = pneg %p148
        $region54: #{tpu_custom_call.1} parent=35 // pred_check_branch
          %442 = sbr.rel (%p440) target = $region56
        $region55: #{tpu_custom_call.1} parent=35 // pred_region
          _
        $region56: #{tpu_custom_call.1} parent=35 // pred_fallthru
          _
        // Predicated region
        $region57: #{tpu_custom_call.1} parent=35 // pred_check
          %p443 = pneg %p148
        $region58: #{tpu_custom_call.1} parent=35 // pred_check_branch
          %445 = sbr.rel (%p443) target = $region60
        $region59: #{tpu_custom_call.1} parent=35 // pred_region
          _
        $region60: #{tpu_custom_call.1} parent=35 // pred_fallthru
          _
      $region36: #{tpu_custom_call.1} parent=5 // pred_fallthru
        _
      %p446 = scmp.le.s32.totalorder 2, %s31
      // Predicated region
      $region61: #{tpu_custom_call.1} parent=5 // pred_check
        %p447 = pneg %p446
      $region62: #{tpu_custom_call.1} parent=5 // pred_check_branch
        %449 = sbr.rel (%p447) target = $region64
      $region63: #{tpu_custom_call.1} parent=5 // pred_region
        %s450 = ssub.s32 %s31, 2
      $region64: #{tpu_custom_call.1} parent=5 // pred_fallthru
        _
    $region6: #{tpu_custom_call.1} parent=1 // loop_footer
      %s35 = sadd.s32 1, %s31
    $region7: #{tpu_custom_call.1} parent=1 // loop_footer_branch
      %30 = sbr.rel target = $region3
    $region8: #{tpu_custom_call.1} parent=1 // loop_exit
      _
    %451 = vsyncpa [#allocation7], 1
    %s452 = scalar_lea.sflag [#allocation7], 1
    %453 = vsyncpa %s452, 1
    %454 = vsyncpa [#allocation9], 1
    %s455 = scalar_lea.sflag [#allocation9], 1
    %456 = vsyncpa %s455, 1

</llo_original>
